<compile_context>
chip_gen: v5e
topology: v5e:2x2
jax: 0.10.0
libtpu: 0.0.40
codegen_flags: <defaults>
</compile_context>

<pallas_src>
import numpy as np
import jax
import jax.numpy as jnp
from jax.experimental import pallas as pl
from jax.experimental.pallas import tpu as pltpu

POOL_SIZES = (1, 2, 4, 6)
_PP = sum(p * p for p in POOL_SIZES)          # 57 pooled cells across the 4 stages
LANE = 128
_VMEM_LIMIT = 32 * 1024 * 1024                # scoped VMEM request (safe on v5e/v6e/v7x)
_VMEM_BUDGET = 24 * 1024 * 1024               # working-set budget used to size the HW tile


# ----------------------------------------------------------------------------
# Host-side construction of the (tiny, constant) spatial operators.
# ----------------------------------------------------------------------------
def _adaptive_avg_pool_matrix(out_size: int, in_size: int) -> np.ndarray:
    """P[i, j] such that P @ v reproduces nn.AdaptiveAvgPool1d(out_size)."""
    P = np.zeros((out_size, in_size), dtype=np.float32)
    for i in range(out_size):
        start = (i * in_size) // out_size
        end = -((-(i + 1) * in_size) // out_size)      # ceil((i+1)*in/out)
        P[i, start:end] = 1.0 / (end - start)
    return P


def _bilinear_upsample_matrix(out_size: int, in_size: int) -> np.ndarray:
    """U[o, i]: 1-D bilinear interpolation, align_corners=True (F.interpolate)."""
    U = np.zeros((out_size, in_size), dtype=np.float32)
    if in_size == 1:
        U[:, 0] = 1.0
        return U
    scale = (in_size - 1) / (out_size - 1) if out_size > 1 else 0.0
    for o in range(out_size):
        src = o * scale
        i0 = min(int(np.floor(src)), in_size - 1)
        i1 = min(i0 + 1, in_size - 1)
        frac = src - i0
        U[o, i0] += 1.0 - frac
        U[o, i1] += frac
    return U


def _pool_mask_and_inv_area(H: int, W: int, hw_pad: int, pp_pad: int):
    """int8 0/1 pooling-window mask (hw_pad, pp_pad) + exact f32 1/area per column."""
    mask = np.zeros((hw_pad, pp_pad), dtype=np.int8)
    inv_area = np.zeros((pp_pad,), dtype=np.float32)
    off = 0
    for p in POOL_SIZES:
        for i in range(p):
            hs = (i * H) // p
            he = -((-(i + 1) * H) // p)
            for j in range(p):
                ws = (j * W) // p
                we = -((-(j + 1) * W) // p)
                c = off + i * p + j
                rows = (np.arange(hs, he)[:, None] * W +
                        np.arange(ws, we)[None, :]).reshape(-1)
                mask[rows, c] = 1
                inv_area[c] = 1.0 / ((he - hs) * (we - ws))
        off += p * p
    return mask, inv_area


def _upsample_operator(H: int, W: int, hw_pad: int, pp_pad: int) -> np.ndarray:
    """U_all (pp_pad, hw_pad): Z @ U_all sums the bilinearly upsampled stages."""
    HW = H * W
    U = np.zeros((pp_pad, hw_pad), dtype=np.float32)
    off = 0
    for p in POOL_SIZES:
        Uh = _bilinear_upsample_matrix(H, p)
        Uw = _bilinear_upsample_matrix(W, p)
        U[off:off + p * p, :HW] = np.kron(Uh, Uw).T          # (p*p, HW)
        off += p * p
    return U


def _choose_hw_tiling(HW: int, cap_lanes: int):
    """Pick (hw_tile, hw_pad): lane-dense tile with minimal spatial padding."""
    cap = max(1, cap_lanes // LANE)
    base = pl.cdiv(HW, LANE) * LANE           # minimal 128-lane padding
    n = base // LANE
    div = 1
    for c in range(min(n, cap), 0, -1):       # largest divisor tile <= cap
        if n % c == 0:
            div = c
            break
    if div * LANE >= min(base, 8 * LANE):
        return div * LANE, base               # exact divisor: no extra pad/slice traffic
    tile = min(base, cap * LANE)              # degenerate divisor structure: pad a little
    return tile, pl.cdiv(base, tile) * tile


# ----------------------------------------------------------------------------
# Pass 1: pooled-window sums (reduction over HW tiles, output block resident).
# ----------------------------------------------------------------------------
def _ppm_pool_kernel(x_ref, pmask_ref, pooled_ref):
    t = pl.program_id(1)

    @pl.when(t == 0)
    def _():
        pooled_ref[...] = jnp.zeros_like(pooled_ref)

    # int8 0/1 window mask -> exact bf16 0/1; (C, hw_tile) @ (hw_tile, pp_pad).
    mask = pmask_ref[...].astype(jnp.bfloat16)
    pooled_ref[0] = pooled_ref[0] + jnp.dot(
        x_ref[0], mask, preferred_element_type=jnp.float32)


# ----------------------------------------------------------------------------
# Pass 2: identity branch + upsampled stage features + folded BN + ReLU.
# ----------------------------------------------------------------------------
def _ppm_main_kernel(x_ref, z_ref, wfx_ref, u_ref, shift_ref, o_ref):
    acc = jnp.dot(wfx_ref[...], x_ref[0], preferred_element_type=jnp.float32)
    acc = acc + jnp.dot(z_ref[0], u_ref[...], preferred_element_type=jnp.float32)
    # BN scale already folded into wfx / Z; only the shift + ReLU remain.
    o_ref[0] = jnp.maximum(acc + shift_ref[...], 0.0).astype(o_ref.dtype)


# ----------------------------------------------------------------------------
# Wrapper
# ----------------------------------------------------------------------------
def pyramid_pooling_module(x_nchw, params, *, out_dtype=jnp.bfloat16,
                           hw_tile_cap=8192):
    N, C, H, W = x_nchw.shape
    assert C % 4 == 0, "PyramidPoolingModule requires in_channels % 4 == 0"
    HW = H * W
    hid = C // 4
    Cout = params["wf"].shape[0]
    pp_pad = pl.cdiv(_PP, 64) * 64                                 # 57 -> 64

    # VMEM-aware lane cap: double-buffered pass-2 streams + pass-1 int8 mask.
    out_bytes = np.dtype(out_dtype).itemsize
    lane_bytes = 2 * (2 * C + 2 * pp_pad + out_bytes * Cout) + pp_pad
    cap = max(LANE, min(int(hw_tile_cap), _VMEM_BUDGET // lane_bytes))
    hw_tile, hw_pad = _choose_hw_tiling(HW, cap)
    num_tiles = hw_pad // hw_tile

    # Constant factored spatial operators (a few KiB per pixel-column, O(HW)).
    pmask_np, inv_area_np = _pool_mask_and_inv_area(H, W, hw_pad, pp_pad)
    pmask = jnp.asarray(pmask_np)                                  # int8 0/1
    U_all = jnp.asarray(_upsample_operator(H, W, hw_pad, pp_pad)).astype(jnp.bfloat16)

    # Fold BN scale into the channel-mixing weights (eval-mode BatchNorm).
    wf = params["wf"].astype(jnp.float32)                          # (Cout, 2C), bias=False
    ws = params["ws"].astype(jnp.float32)                          # (4, hid, C)
    scale = params["scale"].astype(jnp.float32)
    shift = params["shift"].reshape(Cout, 1).astype(jnp.float32)
    wfx = (scale[:, None] * wf[:, :C]).astype(jnp.bfloat16)        # identity branch
    wfold = [scale[:, None] * (wf[:, C + s * hid: C + (s + 1) * hid] @ ws[s])
             for s in range(4)]                                    # 4 x (Cout, C), f32

    # bf16 activations; pad the flattened spatial axis only when necessary.
    x2d = x_nchw.reshape(N, C, HW).astype(jnp.bfloat16)
    if hw_pad != HW:
        x2d = jnp.pad(x2d, ((0, 0), (0, 0), (0, hw_pad - HW)))

    # ---- pass 1: pooled-window sums --------------------------------------
    pooled = pl.pallas_call(
        _ppm_pool_kernel,
        out_shape=jax.ShapeDtypeStruct((N, C, pp_pad), jnp.float32),
        grid_spec=pltpu.PrefetchScalarGridSpec(
            num_scalar_prefetch=0,
            grid=(N, num_tiles),
            in_specs=[
                pl.BlockSpec((1, C, hw_tile), lambda n, t: (n, 0, t)),   # x
                pl.BlockSpec((hw_tile, pp_pad), lambda n, t: (t, 0)),    # int8 mask
            ],
            out_specs=pl.BlockSpec((1, C, pp_pad), lambda n, t: (n, 0, 0)),
        ),
        compiler_params=pltpu.CompilerParams(
            dimension_semantics=("parallel", "arbitrary"),
            vmem_limit_bytes=_VMEM_LIMIT),
    )(x2d, pmask)

    # ---- between passes (host, tiny, exact f32): averages + stage convs ----
    pooled = pooled * jnp.asarray(inv_area_np)[None, None, :]      # exact 1/area
    zs, off = [], 0
    for s, p in enumerate(POOL_SIZES):
        zs.append(jnp.einsum('oc,ncq->noq', wfold[s],
                             pooled[:, :, off:off + p * p]))
        off += p * p
    z = jnp.concatenate(zs, axis=2)                                # (N, Cout, 57)
    z = jnp.pad(z, ((0, 0), (0, 0), (0, pp_pad - off))).astype(jnp.bfloat16)

    # ---- pass 2: streamed main compute + shift + ReLU ----------------------
    # Grid is (tile, batch) so each U tile is DMA'd once and reused across n.
    out2d = pl.pallas_call(
        _ppm_main_kernel,
        out_shape=jax.ShapeDtypeStruct((N, Cout, hw_pad), out_dtype),
        grid_spec=pltpu.PrefetchScalarGridSpec(
            num_scalar_prefetch=0,
            grid=(num_tiles, N),
            in_specs=[
                pl.BlockSpec((1, C, hw_tile), lambda t, n: (n, 0, t)),     # x
                pl.BlockSpec((1, Cout, pp_pad), lambda t, n: (n, 0, 0)),   # Z
                pl.BlockSpec((Cout, C), lambda t, n: (0, 0)),              # wfx (scaled)
                pl.BlockSpec((pp_pad, hw_tile), lambda t, n: (0, t)),      # U_all
                pl.BlockSpec((Cout, 1), lambda t, n: (0, 0)),              # BN shift
            ],
            out_specs=pl.BlockSpec((1, Cout, hw_tile), lambda t, n: (n, 0, t)),
        ),
        compiler_params=pltpu.CompilerParams(
            dimension_semantics=("parallel", "parallel"),
            vmem_limit_bytes=_VMEM_LIMIT),
    )(x2d, z, wfx, U_all, shift)

    if hw_pad != HW:
        out2d = out2d[:, :, :HW]
    return out2d.reshape(N, Cout, H, W)


# ----------------------------------------------------------------------------
# Deterministic parameter initialization (synthetic; matches module shapes).
# ----------------------------------------------------------------------------
def init_params(key, in_channels, out_channels, bn_eps=1e-5):
    hid = in_channels // 4
    k = jax.random.split(key, 6)

    # per-stage conv1x1 weights (bias=False): (hid, C) each
    ws = jax.random.normal(k[0], (4, hid, in_channels), jnp.float32) * (
        1.0 / np.sqrt(in_channels))
    # final PW conv (bias=False since PPM passes bias=False): (Cout, 2C)
    wf = jax.random.normal(k[1], (out_channels, 2 * in_channels), jnp.float32) * (
        1.0 / np.sqrt(2 * in_channels))

    # BatchNorm2d(out_channels) — eval-mode stats/affine folded to scale/shift.
    gamma = 1.0 + 0.1 * jax.random.normal(k[2], (out_channels,), jnp.float32)
    beta = 0.1 * jax.random.normal(k[3], (out_channels,), jnp.float32)
    run_mean = 0.1 * jax.random.normal(k[4], (out_channels,), jnp.float32)
    run_var = jax.nn.softplus(
        jax.random.normal(k[5], (out_channels,), jnp.float32)) + 0.5
    scale = gamma / jnp.sqrt(run_var + bn_eps)
    shift = beta - run_mean * scale

    return {"wf": wf, "ws": ws, "scale": scale, "shift": shift}


# ----------------------------------------------------------------------------
# Pure-JAX f32 reference (explicit pool -> conv -> bilinear upsample -> concat)
# ----------------------------------------------------------------------------
def reference(x, params):
    N, C, H, W = x.shape
    feats = [x]
    for s, p in enumerate(POOL_SIZES):
        Ph = jnp.asarray(_adaptive_avg_pool_matrix(p, H))
        Pw = jnp.asarray(_adaptive_avg_pool_matrix(p, W))
        Uh = jnp.asarray(_bilinear_upsample_matrix(H, p))
        Uw = jnp.asarray(_bilinear_upsample_matrix(W, p))
        pooled = jnp.einsum('ph,nchw,qw->ncpq', Ph, x, Pw)            # AdaptiveAvgPool2d
        conv = jnp.einsum('dc,ncpq->ndpq', params["ws"][s], pooled)   # conv1x1
        up = jnp.einsum('yp,ndpq,xq->ndyx', Uh, conv, Uw)             # bilinear, align_corners
        feats.append(up)
    cat = jnp.concatenate(feats, axis=1)                              # (N, 2C, H, W)
    z = jnp.einsum('oc,nchw->nohw', params["wf"], cat)                # PW conv, no bias
    z = z * params["scale"][None, :, None, None] + params["shift"][None, :, None, None]
    return jnp.maximum(z, 0.0)                                        # ReLU


if __name__ == "__main__":
    N, C, H, W = 2, 16, 16, 16   # in_channels=16 -> hid_channels=4
    Cout = 16

    key = jax.random.PRNGKey(0)
    kx, kp = jax.random.split(key)
    x = jax.random.normal(kx, (N, C, H, W), jnp.float32)
    params = init_params(kp, C, Cout)

    fwd = jax.jit(lambda xx: pyramid_pooling_module(xx, params))
    out = jax.block_until_ready(fwd(x))

    ref = jax.block_until_ready(reference(x, params))
    np.testing.assert_allclose(np.asarray(out.astype(jnp.float32)),
                               np.asarray(ref), rtol=2e-2, atol=2e-2)
    print("KERNEL_OK")
</pallas_src>

<mosaic_0001>
module attributes {stable_mosaic.version = 11 : i64} {
  func.func @_ppm_pool_kernel(%arg0: i32, %arg1: i32, %arg2: memref<1x16x256xbf16, #tpu.memory_space<vmem>>, %arg3: memref<256x64xi8, #tpu.memory_space<vmem>>, %arg4: memref<1x16x64xf32, #tpu.memory_space<vmem>>) attributes {dimension_semantics = [#tpu.dimension_semantics<parallel>, #tpu.dimension_semantics<arbitrary>], iteration_bounds = array<i64: 2, 1>, scalar_prefetch = 0 : i64, scratch_operands = 0 : i64, tpu.core_type = #tpu.core_type<tc>, window_params = [{transform_indices = @transform_0, window_bounds = array<i64: 1, 16, 256>}, {transform_indices = @transform_1, window_bounds = array<i64: 256, 64>}, {transform_indices = @transform_2, window_bounds = array<i64: 1, 16, 64>}]} {
    %c0_i32 = arith.constant 0 : i32
    %0 = arith.cmpi eq, %arg1, %c0_i32 : i32
    %1 = arith.extui %0 : i1 to i32
    %c0_i32_0 = arith.constant 0 : i32
    %2 = arith.cmpi ne, %1, %c0_i32_0 : i32
    scf.if %2 {
      %cst_11 = arith.constant 0.000000e+00 : f32
      %14 = vector.broadcast %cst_11 : f32 to vector<1x16x64xf32>
      %c0_12 = arith.constant 0 : index
      %c0_13 = arith.constant 0 : index
      %c0_14 = arith.constant 0 : index
      %15 = vector.load %arg4[%c0_12, %c0_13, %c0_14] : memref<1x16x64xf32, #tpu.memory_space<vmem>>, vector<1x16x64xf32>
      tpu.vector_store %arg4[%c0_12, %c0_13, %c0_14], %14 {strides = array<i32>} : memref<1x16x64xf32, #tpu.memory_space<vmem>>, vector<1x16x64xf32>,
    } else {
    }
    %c0 = arith.constant 0 : index
    %c0_1 = arith.constant 0 : index
    %3 = vector.load %arg3[%c0, %c0_1] : memref<256x64xi8, #tpu.memory_space<vmem>>, vector<256x64xi8>
    %4 = arith.sitofp %3 : vector<256x64xi8> to vector<256x64xbf16>
    %c0_2 = arith.constant 0 : index
    %c0_3 = arith.constant 0 : index
    %c0_4 = arith.constant 0 : index
    %5 = vector.load %arg4[%c0_2, %c0_3, %c0_4] : memref<1x16x64xf32, #tpu.memory_space<vmem>>, vector<1x16x64xf32>
    %6 = vector.shape_cast %5 : vector<1x16x64xf32> to vector<16x64xf32>
    %c0_5 = arith.constant 0 : index
    %c0_6 = arith.constant 0 : index
    %c0_7 = arith.constant 0 : index
    %7 = vector.load %arg2[%c0_5, %c0_6, %c0_7] : memref<1x16x256xbf16, #tpu.memory_space<vmem>>, vector<1x16x256xbf16>
    %8 = vector.shape_cast %7 : vector<1x16x256xbf16> to vector<16x256xbf16>
    %cst = arith.constant dense<0.000000e+00> : vector<16x64xf32>
    %9 = tpu.matmul %8, %4, %cst {dimension_numbers = #tpu.dot_dimension_numbers<[1], [0], [0], [1], [0, 0, 1, 1], [], []>} : vector<16x256xbf16>, vector<256x64xbf16>, vector<16x64xf32> -> vector<16x64xf32>
    %10 = arith.addf %6, %9 : vector<16x64xf32>
    %c0_8 = arith.constant 0 : index
    %c0_9 = arith.constant 0 : index
    %c0_10 = arith.constant 0 : index
    %11 = vector.load %arg4[%c0_8, %c0_9, %c0_10] : memref<1x16x64xf32, #tpu.memory_space<vmem>>, vector<1x16x64xf32>
    %12 = vector.shape_cast %11 : vector<1x16x64xf32> to vector<16x64xf32>
    %13 = vector.shape_cast %10 : vector<16x64xf32> to vector<1x16x64xf32>
    tpu.vector_store %arg4[%c0_8, %c0_9, %c0_10], %13 {strides = array<i32>} : memref<1x16x64xf32, #tpu.memory_space<vmem>>, vector<1x16x64xf32>,
    return
  }
  func.func @transform_0(%arg0: i32, %arg1: i32) -> (i32, i32, i32) {
    %c0_i32 = arith.constant 0 : i32
    %c0_i32_0 = arith.constant 0 : i32
    return %arg0, %c0_i32, %arg1 : i32, i32, i32
  }
  func.func @transform_1(%arg0: i32, %arg1: i32) -> (i32, i32) {
    %c0_i32 = arith.constant 0 : i32
    %c0_i32_0 = arith.constant 0 : i32
    return %arg1, %c0_i32 : i32, i32
  }
  func.func @transform_2(%arg0: i32, %arg1: i32) -> (i32, i32, i32) {
    %c0_i32 = arith.constant 0 : i32
    %c0_i32_0 = arith.constant 0 : i32
    %c0_i32_1 = arith.constant 0 : i32
    return %arg0, %c0_i32, %c0_i32_0 : i32, i32, i32
  }
}

module attributes {stable_mosaic.version = 11 : i64} {
  func.func @_ppm_main_kernel(%arg0: i32, %arg1: i32, %arg2: memref<1x16x256xbf16, #tpu.memory_space<vmem>>, %arg3: memref<1x16x64xbf16, #tpu.memory_space<vmem>>, %arg4: memref<16x16xbf16, #tpu.memory_space<vmem>>, %arg5: memref<64x256xbf16, #tpu.memory_space<vmem>>, %arg6: memref<16x1xf32, #tpu.memory_space<vmem>>, %arg7: memref<1x16x256xbf16, #tpu.memory_space<vmem>>) attributes {dimension_semantics = [#tpu.dimension_semantics<parallel>, #tpu.dimension_semantics<parallel>], iteration_bounds = array<i64: 1, 2>, scalar_prefetch = 0 : i64, scratch_operands = 0 : i64, tpu.core_type = #tpu.core_type<tc>, window_params = [{transform_indices = @transform_0, window_bounds = array<i64: 1, 16, 256>}, {transform_indices = @transform_1, window_bounds = array<i64: 1, 16, 64>}, {pipeline_mode = #tpu.pipeline_mode<synchronous>, transform_indices = @transform_2, window_bounds = array<i64: 16, 16>}, {transform_indices = @transform_3, window_bounds = array<i64: 64, 256>}, {pipeline_mode = #tpu.pipeline_mode<synchronous>, transform_indices = @transform_4, window_bounds = array<i64: 16, 1>}, {transform_indices = @transform_5, window_bounds = array<i64: 1, 16, 256>}]} {
    %c0 = arith.constant 0 : index
    %c0_0 = arith.constant 0 : index
    %0 = vector.load %arg4[%c0, %c0_0] : memref<16x16xbf16, #tpu.memory_space<vmem>>, vector<16x16xbf16>
    %c0_1 = arith.constant 0 : index
    %c0_2 = arith.constant 0 : index
    %c0_3 = arith.constant 0 : index
    %1 = vector.load %arg2[%c0_1, %c0_2, %c0_3] : memref<1x16x256xbf16, #tpu.memory_space<vmem>>, vector<1x16x256xbf16>
    %2 = vector.shape_cast %1 : vector<1x16x256xbf16> to vector<16x256xbf16>
    %cst = arith.constant dense<0.000000e+00> : vector<16x256xf32>
    %3 = tpu.matmul %0, %2, %cst {dimension_numbers = #tpu.dot_dimension_numbers<[1], [0], [0], [1], [0, 0, 1, 1], [], []>} : vector<16x16xbf16>, vector<16x256xbf16>, vector<16x256xf32> -> vector<16x256xf32>
    %c0_4 = arith.constant 0 : index
    %c0_5 = arith.constant 0 : index
    %c0_6 = arith.constant 0 : index
    %4 = vector.load %arg3[%c0_4, %c0_5, %c0_6] : memref<1x16x64xbf16, #tpu.memory_space<vmem>>, vector<1x16x64xbf16>
    %5 = vector.shape_cast %4 : vector<1x16x64xbf16> to vector<16x64xbf16>
    %c0_7 = arith.constant 0 : index
    %c0_8 = arith.constant 0 : index
    %6 = vector.load %arg5[%c0_7, %c0_8] : memref<64x256xbf16, #tpu.memory_space<vmem>>, vector<64x256xbf16>
    %cst_9 = arith.constant dense<0.000000e+00> : vector<16x256xf32>
    %7 = tpu.matmul %5, %6, %cst_9 {dimension_numbers = #tpu.dot_dimension_numbers<[1], [0], [0], [1], [0, 0, 1, 1], [], []>} : vector<16x64xbf16>, vector<64x256xbf16>, vector<16x256xf32> -> vector<16x256xf32>
    %8 = arith.addf %3, %7 : vector<16x256xf32>
    %c0_10 = arith.constant 0 : index
    %c0_11 = arith.constant 0 : index
    %9 = vector.load %arg6[%c0_10, %c0_11] : memref<16x1xf32, #tpu.memory_space<vmem>>, vector<16x1xf32>
    %10 = vector.broadcast %9 : vector<16x1xf32> to vector<16x256xf32>
    %11 = arith.addf %8, %10 : vector<16x256xf32>
    %cst_12 = arith.constant 0.000000e+00 : f32
    %12 = vector.broadcast %cst_12 : f32 to vector<16x256xf32>
    %13 = arith.maximumf %11, %12 : vector<16x256xf32>
    %14 = arith.truncf %13 : vector<16x256xf32> to vector<16x256xbf16>
    %c0_13 = arith.constant 0 : index
    %c0_14 = arith.constant 0 : index
    %c0_15 = arith.constant 0 : index
    %15 = vector.load %arg7[%c0_13, %c0_14, %c0_15] : memref<1x16x256xbf16, #tpu.memory_space<vmem>>, vector<1x16x256xbf16>
    %16 = vector.shape_cast %15 : vector<1x16x256xbf16> to vector<16x256xbf16>
    %17 = vector.shape_cast %14 : vector<16x256xbf16> to vector<1x16x256xbf16>
    tpu.vector_store %arg7[%c0_13, %c0_14, %c0_15], %17 {strides = array<i32>} : memref<1x16x256xbf16, #tpu.memory_space<vmem>>, vector<1x16x256xbf16>,
    return
  }
  func.func @transform_0(%arg0: i32, %arg1: i32) -> (i32, i32, i32) {
    %c0_i32 = arith.constant 0 : i32
    %c0_i32_0 = arith.constant 0 : i32
    return %arg1, %c0_i32, %arg0 : i32, i32, i32
  }
  func.func @transform_1(%arg0: i32, %arg1: i32) -> (i32, i32, i32) {
    %c0_i32 = arith.constant 0 : i32
    %c0_i32_0 = arith.constant 0 : i32
    %c0_i32_1 = arith.constant 0 : i32
    return %arg1, %c0_i32, %c0_i32_0 : i32, i32, i32
  }
  func.func @transform_2(%arg0: i32, %arg1: i32) -> (i32, i32) {
    %c0_i32 = arith.constant 0 : i32
    %c0_i32_0 = arith.constant 0 : i32
    %c0_i32_1 = arith.constant 0 : i32
    return %c0_i32, %c0_i32_0 : i32, i32
  }
  func.func @transform_3(%arg0: i32, %arg1: i32) -> (i32, i32) {
    %c0_i32 = arith.constant 0 : i32
    %c0_i32_0 = arith.constant 0 : i32
    return %c0_i32, %arg0 : i32, i32
  }
  func.func @transform_4(%arg0: i32, %arg1: i32) -> (i32, i32) {
    %c0_i32 = arith.constant 0 : i32
    %c0_i32_0 = arith.constant 0 : i32
    %c0_i32_1 = arith.constant 0 : i32
    return %c0_i32, %c0_i32_0 : i32, i32
  }
  func.func @transform_5(%arg0: i32, %arg1: i32) -> (i32, i32, i32) {
    %c0_i32 = arith.constant 0 : i32
    %c0_i32_0 = arith.constant 0 : i32
    return %arg1, %c0_i32, %arg0 : i32, i32, i32
  }
}

</mosaic_0001>

<llo_original>
// kernel: _lambda_.2
$region0: #{_lambda_.2}
  #allocation0 [shape = 'u32[]', space=smem, size = 0x4, offset = 0x4, fixed_abs, tag = 'smem constant byte address 0x4 - core index']
  #allocation1 [shape = 'u32[72,128]{1,0:T(1,128)}', space=vmem, size = 0x9000, scoped, tag = 'internal scratch']
  %s0 = inlined_call_operand.vmem [shape: bf16[2,16,256], index: 0, kind: input, shape index: {}]
  %s1 = inlined_call_operand.vmem [shape: s8[256,64], index: 1, kind: input, shape index: {}]
  %s2 = inlined_call_operand.vmem [shape: f32[2,16,64], index: 2, kind: output, shape index: {}]
  %s3 = sld [smem:[#allocation0]]
  $region45: #{_lambda_.2} parent=0
    _
  %s5 = ssub.s32 1, %s3
  %s6 = scalar_select 0, %s5, %s3
  loop: start=0, step=1, limit=4
  $region2: #{_lambda_.2} parent=0 // loop_pre_header
    _
  $region3: #{_lambda_.2} parent=0 // loop_header
    %s8 = sphi 0, %s12
    %p9 = scmp.ge.s32.totalorder %s8, 4
    %s15 = sphi 0, %s27
    %s16 = sphi 0, %s23
    %s17 = sphi 0, %s15
    %s18 = sphi 0, %s16
    %s19 = sphi 0, %s17
    %s20 = sphi 0, %s18
    %s32 = sphi 0, %s34
    %s35 = sphi 0, %s32
    %s36 = sphi 0, %s35
    %s52 = sphi 0, %s36
    %s58 = sphi 0, %s60
    %s61 = sphi 0, %s58
    %s62 = sphi 0, %s61
    %s78 = sphi 0, %s62
    %s84 = sphi 0, %s86
    %s87 = sphi 0, %s84
    %s88 = sphi 0, %s87
    %s104 = sphi 0, %s88
  $region4: #{_lambda_.2} parent=0 // loop_header_branch
    %11 = sbr.rel (%p9) target = $region8
  $region5: #{_lambda_.2} parent=0 // loop_body
    %s13 = ssub.s32 %s8, 1
    %s14 = ssub.s32 %s8, 2
    %s21 = sadd.s32 1, %s16
    %p22 = scmp.ge.s32.totalorder %s21, 1
    %s23 = scalar_select %p22, 0, %s21
    %s24 = sadd.s32 1, %s15
    %s25 = scalar_select %p22, %s24, %s15
    %p26 = scmp.ge.s32.totalorder %s25, 2
    %s27 = scalar_select %p26, 0, %s25
    %s28 = ssub.s32 %s15, %s27
    %s29 = ssub.s32 %s16, %s23
    %s30 = sor.u32 %s28, %s29
    %p31 = scmp.eq.s32.totalorder %s30, 0
    %s33 = sadd.s32 %s32, 1
    %s34 = scalar_select %p31, %s32, %s33
    %p37 = pneg %p31
    %p38 = scmp.eq.s32.totalorder %s8, 1
    %p39 = por %p37, %p38
    %p40 = scmp.ne.s32.totalorder %s32, %s35
    %p41 = scmp.eq.s32.totalorder %s8, 0
    %p42 = por %p40, %p41
    %p43 = scmp.ne.s32.totalorder %s32, %s35
    %p44 = scmp.eq.s32.totalorder %s13, 1
    %p45 = por %p43, %p44
    %p46 = scmp.ne.s32.totalorder %s35, %s36
    %p47 = scmp.eq.s32.totalorder %s13, 0
    %p48 = por %p46, %p47
    %p49 = scmp.ne.s32.totalorder %s35, %s36
    %p50 = scmp.eq.s32.totalorder %s14, 1
    %p51 = por %p49, %p50
    %p53 = scmp.ne.s32.totalorder %s36, %s52
    %p54 = scmp.eq.s32.totalorder %s14, 0
    %p55 = por %p53, %p54
    %s56 = ssub.s32 %s16, %s23
    %p57 = scmp.eq.s32.totalorder %s56, 0
    %s59 = sadd.s32 %s58, 1
    %s60 = scalar_select %p57, %s58, %s59
    %p63 = pneg %p57
    %p64 = scmp.eq.s32.totalorder %s8, 1
    %p65 = por %p63, %p64
    %p66 = scmp.ne.s32.totalorder %s58, %s61
    %p67 = scmp.eq.s32.totalorder %s8, 0
    %p68 = por %p66, %p67
    %p69 = scmp.ne.s32.totalorder %s58, %s61
    %p70 = scmp.eq.s32.totalorder %s13, 1
    %p71 = por %p69, %p70
    %p72 = scmp.ne.s32.totalorder %s61, %s62
    %p73 = scmp.eq.s32.totalorder %s13, 0
    %p74 = por %p72, %p73
    %p75 = scmp.ne.s32.totalorder %s61, %s62
    %p76 = scmp.eq.s32.totalorder %s14, 1
    %p77 = por %p75, %p76
    %p79 = scmp.ne.s32.totalorder %s62, %s78
    %p80 = scmp.eq.s32.totalorder %s14, 0
    %p81 = por %p79, %p80
    %s82 = ssub.s32 %s15, %s27
    %p83 = scmp.eq.s32.totalorder %s82, 0
    %s85 = sadd.s32 %s84, 1
    %s86 = scalar_select %p83, %s84, %s85
    %p89 = pneg %p83
    %p90 = scmp.eq.s32.totalorder %s8, 1
    %p91 = por %p89, %p90
    %p92 = scmp.ne.s32.totalorder %s84, %s87
    %p93 = scmp.eq.s32.totalorder %s8, 0
    %p94 = por %p92, %p93
    %p95 = scmp.ne.s32.totalorder %s84, %s87
    %p96 = scmp.eq.s32.totalorder %s13, 1
    %p97 = por %p95, %p96
    %p98 = scmp.ne.s32.totalorder %s87, %s88
    %p99 = scmp.eq.s32.totalorder %s13, 0
    %p100 = por %p98, %p99
    %p101 = scmp.ne.s32.totalorder %s87, %s88
    %p102 = scmp.eq.s32.totalorder %s14, 1
    %p103 = por %p101, %p102
    %p105 = scmp.ne.s32.totalorder %s88, %s104
    %p106 = scmp.eq.s32.totalorder %s14, 0
    %p107 = por %p105, %p106
    %p108 = scmp.le.s32.totalorder 1, %s8
    %p109 = scmp.lt.s32.totalorder %s8, 3
    %p110 = pnand %p108, %p109
    %p111 = pneg %p110
    // Predicated region
    $region9: #{_lambda_.2} parent=5 // pred_check
      _
    $region10: #{_lambda_.2} parent=5 // pred_check_branch
      %113 = sbr.rel (%p110) target = $region12
    $region11: #{_lambda_.2} parent=5 // pred_region
      %s114 = ssub.s32 %s8, 1
      // Predicated region
      $region13: #{_lambda_.2} parent=11 // pred_check
        %p115 = pneg %p74
      $region14: #{_lambda_.2} parent=11 // pred_check_branch
        %117 = sbr.rel (%p115) target = $region16
      $region15: #{_lambda_.2} parent=11 // pred_region
        %s118 = smul.u32 8, %s18
        %p119 = scmp.lt.s32.totalorder %s118, 7
        %s120 = scalar_select %p119, %s118, 7
        %s121 = smul.addr %s120, 8
        %s122 = scalar_lea.vmem %s1, %s121
        %s123 = smul.u32 8, %s18
      $region16: #{_lambda_.2} parent=11 // pred_fallthru
        _
    $region12: #{_lambda_.2} parent=5 // pred_fallthru
      _
    %p124 = scmp.lt.s32.totalorder %s8, 2
    // Predicated region
    $region17: #{_lambda_.2} parent=5 // pred_check
      %p125 = pneg %p124
    $region18: #{_lambda_.2} parent=5 // pred_check_branch
      %127 = sbr.rel (%p125) target = $region20
    $region19: #{_lambda_.2} parent=5 // pred_region
      // Predicated region
      $region21: #{_lambda_.2} parent=19 // pred_check
        %p128 = pneg %p42
      $region22: #{_lambda_.2} parent=19 // pred_check_branch
        %130 = sbr.rel (%p128) target = $region24
      $region23: #{_lambda_.2} parent=19 // pred_region
        %s131 = smul.u32 2, %s16
        %p132 = scmp.lt.s32.totalorder %s15, 1
        %s133 = scalar_select %p132, %s15, 1
        %p134 = scmp.lt.s32.totalorder %s131, 1
        %s135 = scalar_select %p134, %s131, 1
        %s136 = smul.addr %s133, 4
        %s137 = sadd.s32 %s135, %s136
        %s138 = smul.addr %s137, 4
        %s139 = scalar_lea.vmem %s0, %s138
        %s140 = smul.u32 2, %s16
      $region24: #{_lambda_.2} parent=19 // pred_fallthru
        _
    $region20: #{_lambda_.2} parent=5 // pred_fallthru
      _
    %p141 = scmp.le.s32.totalorder 1, %s8
    %p142 = scmp.lt.s32.totalorder %s8, 3
    %p143 = pnand %p141, %p142
    %p144 = pneg %p143
    // Predicated region
    $region25: #{_lambda_.2} parent=5 // pred_check
      _
    $region26: #{_lambda_.2} parent=5 // pred_check_branch
      %146 = sbr.rel (%p143) target = $region28
    $region27: #{_lambda_.2} parent=5 // pred_region
      %s147 = ssub.s32 %s8, 1
      %s148 = smul.u32 2, %s18
      %p149 = scmp.lt.s32.totalorder %s17, 1
      %s150 = scalar_select %p149, %s17, 1
      %p151 = scmp.lt.s32.totalorder %s148, 1
      %s152 = scalar_select %p151, %s148, 1
      %s153 = smul.addr %s150, 4
      %s154 = sadd.s32 %s152, %s153
      %s155 = smul.addr %s154, 4
      %s156 = scalar_lea.vmem %s0, %s155
      %p157 = pneg %p48
      %p158 = pneg %p45
      %s159 = smul.u32 8, %s18
      %p160 = scmp.lt.s32.totalorder %s159, 7
      %s161 = scalar_select %p160, %s159, 7
      %s162 = smul.addr %s161, 8
      %s163 = scalar_lea.vmem %s1, %s162
      %p164 = pneg %p74
      %p165 = pneg %p71
      %p166 = pneg %p100
      %p167 = pneg %p97
      %p168 = scmp.lt.s32.totalorder %s17, 1
      %s169 = scalar_select %p168, %s17, 1
      %s170 = smul.addr %s169, 2
      %s171 = smul.addr %s170, 8
      %s172 = scalar_lea.vmem %s2, %s171
      %s173 = smul.u32 2, %s18
      %p174 = scmp.lt.s32.totalorder %s17, 1
      %s175 = scalar_select %p174, %s17, 1
      %p176 = scmp.lt.s32.totalorder %s173, 1
      %s177 = scalar_select %p176, %s173, 1
      %s178 = smul.addr %s175, 4
      %s179 = sadd.s32 %s177, %s178
      %s180 = smul.addr %s179, 4
      %s181 = scalar_lea.vmem %s0, %s180
      %s182 = smul.u32 2, %s18
      %s183 = smul.u32 8, %s18
      %p184 = scmp.lt.s32.totalorder %s183, 7
      %s185 = scalar_select %p184, %s183, 7
      %s186 = smul.addr %s185, 8
      %s187 = scalar_lea.vmem %s1, %s186
      %s188 = smul.u32 8, %s18
      %p189 = scmp.lt.s32.totalorder %s17, 1
      %s190 = scalar_select %p189, %s17, 1
      %s191 = smul.addr %s190, 2
      %s192 = smul.addr %s191, 8
      %s193 = scalar_lea.vmem %s2, %s192
      %p194 = scmp.eq.s32.totalorder %s18, 0
      // Predicated region
      $region29: #{_lambda_.2} parent=27 // pred_check
        %p195 = pneg %p194
      $region30: #{_lambda_.2} parent=27 // pred_check_branch
        %197 = sbr.rel (%p195) target = $region32
      $region31: #{_lambda_.2} parent=27 // pred_region
        %vm198 = vcmask 523264
        %199 = vst.msk [vmem:[%s193] sm:$0xff] %vm198, 0.0
        %200 = vst.msk [vmem:[%s193 + $0x8] sm:$0xff] %vm198, 0.0
      $region32: #{_lambda_.2} parent=27 // pred_fallthru
        _
      %v201 = vld [vmem:[%s187] sm:$0xff]
      %v202 = vld [vmem:[%s187 + $0x8] sm:$0xff]
      %v203 = vld [vmem:[%s187 + $0x10] sm:$0xff]
      %v204 = vld [vmem:[%s187 + $0x18] sm:$0xff]
      %v205 = vld [vmem:[%s187 + $0x20] sm:$0xff]
      %v206 = vld [vmem:[%s187 + $0x28] sm:$0xff]
      %v207 = vld [vmem:[%s187 + $0x30] sm:$0xff]
      %v208 = vld [vmem:[%s187 + $0x38] sm:$0xff]
      %v209 = vunpack.c.0.s8 %v201
      %v210 = vunpack.c.1.s8 %v201
      %v211 = vunpack.c.2.s8 %v201
      %v212 = vunpack.c.3.s8 %v201
      %v213 = vunpack.c.0.s8 %v202
      %v214 = vunpack.c.1.s8 %v202
      %v215 = vunpack.c.2.s8 %v202
      %v216 = vunpack.c.3.s8 %v202
      %v217 = vunpack.c.0.s8 %v203
      %v218 = vunpack.c.1.s8 %v203
      %v219 = vunpack.c.2.s8 %v203
      %v220 = vunpack.c.3.s8 %v203
      %v221 = vunpack.c.0.s8 %v204
      %v222 = vunpack.c.1.s8 %v204
      %v223 = vunpack.c.2.s8 %v204
      %v224 = vunpack.c.3.s8 %v204
      %v225 = vunpack.c.0.s8 %v205
      %v226 = vunpack.c.1.s8 %v205
      %v227 = vunpack.c.2.s8 %v205
      %v228 = vunpack.c.3.s8 %v205
      %v229 = vunpack.c.0.s8 %v206
      %v230 = vunpack.c.1.s8 %v206
      %v231 = vunpack.c.2.s8 %v206
      %v232 = vunpack.c.3.s8 %v206
      %v233 = vunpack.c.0.s8 %v207
      %v234 = vunpack.c.1.s8 %v207
      %v235 = vunpack.c.2.s8 %v207
      %v236 = vunpack.c.3.s8 %v207
      %v237 = vunpack.c.0.s8 %v208
      %v238 = vunpack.c.1.s8 %v208
      %v239 = vunpack.c.2.s8 %v208
      %v240 = vunpack.c.3.s8 %v208
      %v241 = vcvt.s32.f32 %v209
      %v242 = vcvt.s32.f32 %v210
      %v243 = vcvt.s32.f32 %v211
      %v244 = vcvt.s32.f32 %v212
      %v245 = vcvt.s32.f32 %v213
      %v246 = vcvt.s32.f32 %v214
      %v247 = vcvt.s32.f32 %v215
      %v248 = vcvt.s32.f32 %v216
      %v249 = vcvt.s32.f32 %v217
      %v250 = vcvt.s32.f32 %v218
      %v251 = vcvt.s32.f32 %v219
      %v252 = vcvt.s32.f32 %v220
      %v253 = vcvt.s32.f32 %v221
      %v254 = vcvt.s32.f32 %v222
      %v255 = vcvt.s32.f32 %v223
      %v256 = vcvt.s32.f32 %v224
      %v257 = vcvt.s32.f32 %v225
      %v258 = vcvt.s32.f32 %v226
      %v259 = vcvt.s32.f32 %v227
      %v260 = vcvt.s32.f32 %v228
      %v261 = vcvt.s32.f32 %v229
      %v262 = vcvt.s32.f32 %v230
      %v263 = vcvt.s32.f32 %v231
      %v264 = vcvt.s32.f32 %v232
      %v265 = vcvt.s32.f32 %v233
      %v266 = vcvt.s32.f32 %v234
      %v267 = vcvt.s32.f32 %v235
      %v268 = vcvt.s32.f32 %v236
      %v269 = vcvt.s32.f32 %v237
      %v270 = vcvt.s32.f32 %v238
      %v271 = vcvt.s32.f32 %v239
      %v272 = vcvt.s32.f32 %v240
      %v273 = vpack.c.bf16 %v242, %v241
      %v274 = vpack.c.bf16 %v244, %v243
      %v275 = vpack.c.bf16 %v246, %v245
      %v276 = vpack.c.bf16 %v248, %v247
      %v277 = vpack.c.bf16 %v250, %v249
      %v278 = vpack.c.bf16 %v252, %v251
      %v279 = vpack.c.bf16 %v254, %v253
      %v280 = vpack.c.bf16 %v256, %v255
      %v281 = vpack.c.bf16 %v258, %v257
      %v282 = vpack.c.bf16 %v260, %v259
      %v283 = vpack.c.bf16 %v262, %v261
      %v284 = vpack.c.bf16 %v264, %v263
      %v285 = vpack.c.bf16 %v266, %v265
      %v286 = vpack.c.bf16 %v268, %v267
      %v287 = vpack.c.bf16 %v270, %v269
      %v288 = vpack.c.bf16 %v272, %v271
      %v289 = vld [vmem:[%s193] sm:$0xff]
      %v290 = vld [vmem:[%s193 + $0x8] sm:$0xff]
      %v291 = vld [vmem:[%s181] sm:$0xff]
      %v292 = vld [vmem:[%s181 + $0x8] sm:$0xff]
      %v295 = vunpack.c.l.b16 %v291
      %v296 = vunpack.c.h.b16 %v291
      %v297 = vunpack.c.l.b16 %v292
      %v298 = vunpack.c.h.b16 %v292
      %v299 = vpack.c.b16 %v297, %v295
      %v300 = vpack.c.b16 %v298, %v296
      %303 = vmatpush.bf16.msra.mxu0 %v280
      %304 = vmatpush.bf16.msra.mxu0 %v279
      %305 = vmatpush.bf16.msra.mxu0 %v278
      %306 = vmatpush.bf16.msra.mxu0 %v277
      %307 = vmatpush.bf16.msra.mxu0 %v276
      %308 = vmatpush.bf16.msra.mxu0 %v275
      %309 = vmatpush.bf16.msra.mxu0 %v274
      %310 = vmatpush.bf16.msra.mxu0 %v273
      %311 = vmatmul.bf16.gmra.mxu0 %v299
      %v312 = vpop.f32.mrf.mxu0
      %v313 = vadd.f32 0.0, %v312
      %v314 = vpop.f32.mrf.mxu0
      %v315 = vadd.f32 0.0, %v314
      %316 = vdwg.mxu0
      %317 = vmatpush.bf16.msra.mxu0 %v288
      %318 = vmatpush.bf16.msra.mxu0 %v287
      %319 = vmatpush.bf16.msra.mxu0 %v286
      %320 = vmatpush.bf16.msra.mxu0 %v285
      %321 = vmatpush.bf16.msra.mxu0 %v284
      %322 = vmatpush.bf16.msra.mxu0 %v283
      %323 = vmatpush.bf16.msra.mxu0 %v282
      %324 = vmatpush.bf16.msra.mxu0 %v281
      %325 = vmatmul.bf16.gmra.mxu0 %v300
      %v326 = vpop.f32.mrf.mxu0
      %v327 = vadd.f32 %v313, %v326
      %v328 = vpop.f32.mrf.mxu0
      %v329 = vadd.f32 %v315, %v328
      %330 = vdwg.mxu0
      %v331 = vadd.f32 %v289, %v327
      %v332 = vadd.f32 %v290, %v329
      %vm333 = vcmask 523264
      %334 = vst.msk [vmem:[%s193] sm:$0xff] %vm333, %v331
      %335 = vst.msk [vmem:[%s193 + $0x8] sm:$0xff] %vm333, %v332
      %p336 = scmp.lt.s32.totalorder %s17, 1
      %s337 = scalar_select %p336, %s17, 1
      %s338 = smul.addr %s337, 2
      %s339 = smul.addr %s338, 8
      %s340 = scalar_lea.vmem %s2, %s339
      // Predicated region
      $region33: #{_lambda_.2} parent=27 // pred_check
        %p341 = pneg %p97
      $region34: #{_lambda_.2} parent=27 // pred_check_branch
        %343 = sbr.rel (%p341) target = $region36
      $region35: #{_lambda_.2} parent=27 // pred_region
        _
      $region36: #{_lambda_.2} parent=27 // pred_fallthru
        _
    $region28: #{_lambda_.2} parent=5 // pred_fallthru
      _
    %p344 = scmp.le.s32.totalorder 2, %s8
    // Predicated region
    $region37: #{_lambda_.2} parent=5 // pred_check
      %p345 = pneg %p344
    $region38: #{_lambda_.2} parent=5 // pred_check_branch
      %347 = sbr.rel (%p345) target = $region40
    $region39: #{_lambda_.2} parent=5 // pred_region
      %s348 = ssub.s32 %s8, 2
      // Predicated region
      $region41: #{_lambda_.2} parent=39 // pred_check
        %p349 = pneg %p103
      $region42: #{_lambda_.2} parent=39 // pred_check_branch
        %351 = sbr.rel (%p349) target = $region44
      $region43: #{_lambda_.2} parent=39 // pred_region
        %p352 = scmp.lt.s32.totalorder %s19, 1
        %s353 = scalar_select %p352, %s19, 1
        %s354 = smul.addr %s353, 2
        %s355 = smul.addr %s354, 8
        %s356 = scalar_lea.vmem %s2, %s355
      $region44: #{_lambda_.2} parent=39 // pred_fallthru
        _
    $region40: #{_lambda_.2} parent=5 // pred_fallthru
      _
  $region6: #{_lambda_.2} parent=0 // loop_footer
    %s12 = sadd.s32 1, %s8
  $region7: #{_lambda_.2} parent=0 // loop_footer_branch
    %7 = sbr.rel target = $region3
  $region8: #{_lambda_.2} parent=0 // loop_exit
    _

// kernel: _lambda_.3
$region0: #{_lambda_.3}
  #allocation0 [shape = 'u32[]', space=smem, size = 0x4, offset = 0x4, fixed_abs, tag = 'smem constant byte address 0x4 - core index']
  #allocation1 [shape = 'u32[72,128]{1,0:T(1,128)}', space=vmem, size = 0x9000, scoped, tag = 'internal scratch']
  %s0 = inlined_call_operand.vmem [shape: bf16[2,16,256], index: 0, kind: input, shape index: {}]
  %s1 = inlined_call_operand.vmem [shape: bf16[2,16,64], index: 1, kind: input, shape index: {}]
  %s2 = inlined_call_operand.vmem [shape: bf16[16,16], index: 2, kind: input, shape index: {}]
  %s3 = inlined_call_operand.vmem [shape: bf16[64,256], index: 3, kind: input, shape index: {}]
  %s4 = inlined_call_operand.vmem [shape: f32[16,1], index: 4, kind: input, shape index: {}]
  %s5 = inlined_call_operand.vmem [shape: bf16[2,16,256], index: 5, kind: output, shape index: {}]
  %s6 = sld [smem:[#allocation0]]
  $region53: #{_lambda_.3} parent=0
    _
  %s8 = ssub.s32 1, %s6
  %s9 = scalar_select 0, %s8, %s6
  loop: start=0, step=1, limit=4
  $region2: #{_lambda_.3} parent=0 // loop_pre_header
    _
  $region3: #{_lambda_.3} parent=0 // loop_header
    %s11 = sphi 0, %s15
    %p12 = scmp.ge.s32.totalorder %s11, 4
    %s18 = sphi 0, %s30
    %s19 = sphi 0, %s26
    %s20 = sphi 0, %s18
    %s21 = sphi 0, %s19
    %s22 = sphi 0, %s20
    %s23 = sphi 0, %s21
    %s35 = sphi 0, %s37
    %s38 = sphi 0, %s35
    %s39 = sphi 0, %s38
    %s55 = sphi 0, %s39
    %s61 = sphi 0, %s63
    %s64 = sphi 0, %s61
    %s65 = sphi 0, %s64
    %s81 = sphi 0, %s65
    %s85 = sphi 0, %s85
    %s87 = sphi 0, %s85
    %s88 = sphi 0, %s87
    %s102 = sphi 0, %s88
    %s108 = sphi 0, %s110
    %s111 = sphi 0, %s108
    %s112 = sphi 0, %s111
    %s128 = sphi 0, %s112
    %s132 = sphi 0, %s132
    %s134 = sphi 0, %s132
    %s135 = sphi 0, %s134
    %s149 = sphi 0, %s135
    %s157 = sphi 0, %s159
    %s160 = sphi 0, %s157
    %s161 = sphi 0, %s160
    %s177 = sphi 0, %s161
  $region4: #{_lambda_.3} parent=0 // loop_header_branch
    %14 = sbr.rel (%p12) target = $region8
  $region5: #{_lambda_.3} parent=0 // loop_body
    %s16 = ssub.s32 %s11, 1
    %s17 = ssub.s32 %s11, 2
    %s24 = sadd.s32 1, %s19
    %p25 = scmp.ge.s32.totalorder %s24, 2
    %s26 = scalar_select %p25, 0, %s24
    %s27 = sadd.s32 1, %s18
    %s28 = scalar_select %p25, %s27, %s18
    %p29 = scmp.ge.s32.totalorder %s28, 1
    %s30 = scalar_select %p29, 0, %s28
    %s31 = ssub.s32 %s19, %s26
    %s32 = ssub.s32 %s18, %s30
    %s33 = sor.u32 %s31, %s32
    %p34 = scmp.eq.s32.totalorder %s33, 0
    %s36 = sadd.s32 %s35, 1
    %s37 = scalar_select %p34, %s35, %s36
    %p40 = pneg %p34
    %p41 = scmp.eq.s32.totalorder %s11, 1
    %p42 = por %p40, %p41
    %p43 = scmp.ne.s32.totalorder %s35, %s38
    %p44 = scmp.eq.s32.totalorder %s11, 0
    %p45 = por %p43, %p44
    %p46 = scmp.ne.s32.totalorder %s35, %s38
    %p47 = scmp.eq.s32.totalorder %s16, 1
    %p48 = por %p46, %p47
    %p49 = scmp.ne.s32.totalorder %s38, %s39
    %p50 = scmp.eq.s32.totalorder %s16, 0
    %p51 = por %p49, %p50
    %p52 = scmp.ne.s32.totalorder %s38, %s39
    %p53 = scmp.eq.s32.totalorder %s17, 1
    %p54 = por %p52, %p53
    %p56 = scmp.ne.s32.totalorder %s39, %s55
    %p57 = scmp.eq.s32.totalorder %s17, 0
    %p58 = por %p56, %p57
    %s59 = ssub.s32 %s19, %s26
    %p60 = scmp.eq.s32.totalorder %s59, 0
    %s62 = sadd.s32 %s61, 1
    %s63 = scalar_select %p60, %s61, %s62
    %p66 = pneg %p60
    %p67 = scmp.eq.s32.totalorder %s11, 1
    %p68 = por %p66, %p67
    %p69 = scmp.ne.s32.totalorder %s61, %s64
    %p70 = scmp.eq.s32.totalorder %s11, 0
    %p71 = por %p69, %p70
    %p72 = scmp.ne.s32.totalorder %s61, %s64
    %p73 = scmp.eq.s32.totalorder %s16, 1
    %p74 = por %p72, %p73
    %p75 = scmp.ne.s32.totalorder %s64, %s65
    %p76 = scmp.eq.s32.totalorder %s16, 0
    %p77 = por %p75, %p76
    %p78 = scmp.ne.s32.totalorder %s64, %s65
    %p79 = scmp.eq.s32.totalorder %s17, 1
    %p80 = por %p78, %p79
    %p82 = scmp.ne.s32.totalorder %s65, %s81
    %p83 = scmp.eq.s32.totalorder %s17, 0
    %p84 = por %p82, %p83
    %s86 = sadd.s32 %s85, 1
    %p89 = scmp.eq.s32.totalorder %s11, 1
    %p90 = scmp.ne.s32.totalorder %s85, %s87
    %p91 = scmp.eq.s32.totalorder %s11, 0
    %p92 = por %p90, %p91
    %p93 = scmp.ne.s32.totalorder %s85, %s87
    %p94 = scmp.eq.s32.totalorder %s16, 1
    %p95 = por %p93, %p94
    %p96 = scmp.ne.s32.totalorder %s87, %s88
    %p97 = scmp.eq.s32.totalorder %s16, 0
    %p98 = por %p96, %p97
    %p99 = scmp.ne.s32.totalorder %s87, %s88
    %p100 = scmp.eq.s32.totalorder %s17, 1
    %p101 = por %p99, %p100
    %p103 = scmp.ne.s32.totalorder %s88, %s102
    %p104 = scmp.eq.s32.totalorder %s17, 0
    %p105 = por %p103, %p104
    %s106 = ssub.s32 %s18, %s30
    %p107 = scmp.eq.s32.totalorder %s106, 0
    %s109 = sadd.s32 %s108, 1
    %s110 = scalar_select %p107, %s108, %s109
    %p113 = pneg %p107
    %p114 = scmp.eq.s32.totalorder %s11, 1
    %p115 = por %p113, %p114
    %p116 = scmp.ne.s32.totalorder %s108, %s111
    %p117 = scmp.eq.s32.totalorder %s11, 0
    %p118 = por %p116, %p117
    %p119 = scmp.ne.s32.totalorder %s108, %s111
    %p120 = scmp.eq.s32.totalorder %s16, 1
    %p121 = por %p119, %p120
    %p122 = scmp.ne.s32.totalorder %s111, %s112
    %p123 = scmp.eq.s32.totalorder %s16, 0
    %p124 = por %p122, %p123
    %p125 = scmp.ne.s32.totalorder %s111, %s112
    %p126 = scmp.eq.s32.totalorder %s17, 1
    %p127 = por %p125, %p126
    %p129 = scmp.ne.s32.totalorder %s112, %s128
    %p130 = scmp.eq.s32.totalorder %s17, 0
    %p131 = por %p129, %p130
    %s133 = sadd.s32 %s132, 1
    %p136 = scmp.eq.s32.totalorder %s11, 1
    %p137 = scmp.ne.s32.totalorder %s132, %s134
    %p138 = scmp.eq.s32.totalorder %s11, 0
    %p139 = por %p137, %p138
    %p140 = scmp.ne.s32.totalorder %s132, %s134
    %p141 = scmp.eq.s32.totalorder %s16, 1
    %p142 = por %p140, %p141
    %p143 = scmp.ne.s32.totalorder %s134, %s135
    %p144 = scmp.eq.s32.totalorder %s16, 0
    %p145 = por %p143, %p144
    %p146 = scmp.ne.s32.totalorder %s134, %s135
    %p147 = scmp.eq.s32.totalorder %s17, 1
    %p148 = por %p146, %p147
    %p150 = scmp.ne.s32.totalorder %s135, %s149
    %p151 = scmp.eq.s32.totalorder %s17, 0
    %p152 = por %p150, %p151
    %s153 = ssub.s32 %s19, %s26
    %s154 = ssub.s32 %s18, %s30
    %s155 = sor.u32 %s153, %s154
    %p156 = scmp.eq.s32.totalorder %s155, 0
    %s158 = sadd.s32 %s157, 1
    %s159 = scalar_select %p156, %s157, %s158
    %p162 = pneg %p156
    %p163 = scmp.eq.s32.totalorder %s11, 1
    %p164 = por %p162, %p163
    %p165 = scmp.ne.s32.totalorder %s157, %s160
    %p166 = scmp.eq.s32.totalorder %s11, 0
    %p167 = por %p165, %p166
    %p168 = scmp.ne.s32.totalorder %s157, %s160
    %p169 = scmp.eq.s32.totalorder %s16, 1
    %p170 = por %p168, %p169
    %p171 = scmp.ne.s32.totalorder %s160, %s161
    %p172 = scmp.eq.s32.totalorder %s16, 0
    %p173 = por %p171, %p172
    %p174 = scmp.ne.s32.totalorder %s160, %s161
    %p175 = scmp.eq.s32.totalorder %s17, 1
    %p176 = por %p174, %p175
    %p178 = scmp.ne.s32.totalorder %s161, %s177
    %p179 = scmp.eq.s32.totalorder %s17, 0
    %p180 = por %p178, %p179
    %p181 = scmp.le.s32.totalorder 1, %s11
    %p182 = scmp.lt.s32.totalorder %s11, 3
    %p183 = pnand %p181, %p182
    %p184 = pneg %p183
    // Predicated region
    $region9: #{_lambda_.3} parent=5 // pred_check
      _
    $region10: #{_lambda_.3} parent=5 // pred_check_branch
      %186 = sbr.rel (%p183) target = $region12
    $region11: #{_lambda_.3} parent=5 // pred_region
      %s187 = ssub.s32 %s11, 1
      // Predicated region
      $region13: #{_lambda_.3} parent=11 // pred_check
        %p188 = pneg %p98
      $region14: #{_lambda_.3} parent=11 // pred_check_branch
        %190 = sbr.rel (%p188) target = $region16
      $region15: #{_lambda_.3} parent=11 // pred_region
        _
      $region16: #{_lambda_.3} parent=11 // pred_fallthru
        _
      // Predicated region
      $region17: #{_lambda_.3} parent=11 // pred_check
        %p191 = pneg %p124
      $region18: #{_lambda_.3} parent=11 // pred_check_branch
        %193 = sbr.rel (%p191) target = $region20
      $region19: #{_lambda_.3} parent=11 // pred_region
        %s194 = smul.u32 2, %s20
        %p195 = scmp.lt.s32.totalorder %s194, 1
        %s196 = scalar_select %p195, %s194, 1
        %s197 = smul.addr %s196, 4
        %s198 = scalar_lea.vmem %s3, %s197
        %s199 = smul.u32 2, %s20
      $region20: #{_lambda_.3} parent=11 // pred_fallthru
        _
      // Predicated region
      $region21: #{_lambda_.3} parent=11 // pred_check
        %p200 = pneg %p145
      $region22: #{_lambda_.3} parent=11 // pred_check_branch
        %202 = sbr.rel (%p200) target = $region24
      $region23: #{_lambda_.3} parent=11 // pred_region
        _
      $region24: #{_lambda_.3} parent=11 // pred_fallthru
        _
    $region12: #{_lambda_.3} parent=5 // pred_fallthru
      _
    %p203 = scmp.lt.s32.totalorder %s11, 2
    // Predicated region
    $region25: #{_lambda_.3} parent=5 // pred_check
      %p204 = pneg %p203
    $region26: #{_lambda_.3} parent=5 // pred_check_branch
      %206 = sbr.rel (%p204) target = $region28
    $region27: #{_lambda_.3} parent=5 // pred_region
      // Predicated region
      $region29: #{_lambda_.3} parent=27 // pred_check
        %p207 = pneg %p45
      $region30: #{_lambda_.3} parent=27 // pred_check_branch
        %209 = sbr.rel (%p207) target = $region32
      $region31: #{_lambda_.3} parent=27 // pred_region
        %s210 = smul.u32 2, %s18
        %p211 = scmp.lt.s32.totalorder %s19, 1
        %s212 = scalar_select %p211, %s19, 1
        %p213 = scmp.lt.s32.totalorder %s210, 1
        %s214 = scalar_select %p213, %s210, 1
        %s215 = smul.addr %s212, 4
        %s216 = sadd.s32 %s214, %s215
        %s217 = smul.addr %s216, 4
        %s218 = scalar_lea.vmem %s0, %s217
        %s219 = smul.u32 2, %s18
      $region32: #{_lambda_.3} parent=27 // pred_fallthru
        _
      // Predicated region
      $region33: #{_lambda_.3} parent=27 // pred_check
        %p220 = pneg %p71
      $region34: #{_lambda_.3} parent=27 // pred_check_branch
        %222 = sbr.rel (%p220) target = $region36
      $region35: #{_lambda_.3} parent=27 // pred_region
        %p223 = scmp.lt.s32.totalorder %s19, 1
        %s224 = scalar_select %p223, %s19, 1
        %s225 = smul.addr %s224, 2
        %s226 = smul.addr %s225, 4
        %s227 = scalar_lea.vmem %s1, %s226
      $region36: #{_lambda_.3} parent=27 // pred_fallthru
        _
    $region28: #{_lambda_.3} parent=5 // pred_fallthru
      _
    %p228 = scmp.le.s32.totalorder 1, %s11
    %p229 = scmp.lt.s32.totalorder %s11, 3
    %p230 = pnand %p228, %p229
    %p231 = pneg %p230
    // Predicated region
    $region37: #{_lambda_.3} parent=5 // pred_check
      _
    $region38: #{_lambda_.3} parent=5 // pred_check_branch
      %233 = sbr.rel (%p230) target = $region40
    $region39: #{_lambda_.3} parent=5 // pred_region
      %s234 = ssub.s32 %s11, 1
      %s235 = smul.u32 2, %s20
      %p236 = scmp.lt.s32.totalorder %s21, 1
      %s237 = scalar_select %p236, %s21, 1
      %p238 = scmp.lt.s32.totalorder %s235, 1
      %s239 = scalar_select %p238, %s235, 1
      %s240 = smul.addr %s237, 4
      %s241 = sadd.s32 %s239, %s240
      %s242 = smul.addr %s241, 4
      %s243 = scalar_lea.vmem %s0, %s242
      %p244 = pneg %p51
      %p245 = pneg %p48
      %p246 = scmp.lt.s32.totalorder %s21, 1
      %s247 = scalar_select %p246, %s21, 1
      %s248 = smul.addr %s247, 2
      %s249 = smul.addr %s248, 4
      %s250 = scalar_lea.vmem %s1, %s249
      %p251 = pneg %p77
      %p252 = pneg %p74
      %p253 = pneg %p98
      %p254 = pneg %p95
      %s255 = smul.u32 2, %s20
      %p256 = scmp.lt.s32.totalorder %s255, 1
      %s257 = scalar_select %p256, %s255, 1
      %s258 = smul.addr %s257, 4
      %s259 = scalar_lea.vmem %s3, %s258
      %p260 = pneg %p124
      %p261 = pneg %p121
      %p262 = pneg %p145
      %p263 = pneg %p142
      %p264 = pneg %p173
      %p265 = pneg %p170
      %s266 = smul.u32 2, %s20
      %p267 = scmp.lt.s32.totalorder %s21, 1
      %s268 = scalar_select %p267, %s21, 1
      %p269 = scmp.lt.s32.totalorder %s266, 1
      %s270 = scalar_select %p269, %s266, 1
      %s271 = smul.addr %s268, 4
      %s272 = sadd.s32 %s270, %s271
      %s273 = smul.addr %s272, 4
      %s274 = scalar_lea.vmem %s5, %s273
      %s275 = smul.u32 2, %s20
      %p276 = scmp.lt.s32.totalorder %s21, 1
      %s277 = scalar_select %p276, %s21, 1
      %p278 = scmp.lt.s32.totalorder %s275, 1
      %s279 = scalar_select %p278, %s275, 1
      %s280 = smul.addr %s277, 4
      %s281 = sadd.s32 %s279, %s280
      %s282 = smul.addr %s281, 4
      %s283 = scalar_lea.vmem %s0, %s282
      %s284 = smul.u32 2, %s20
      %p285 = scmp.lt.s32.totalorder %s21, 1
      %s286 = scalar_select %p285, %s21, 1
      %s287 = smul.addr %s286, 2
      %s288 = smul.addr %s287, 4
      %s289 = scalar_lea.vmem %s1, %s288
      %s290 = smul.u32 2, %s20
      %p291 = scmp.lt.s32.totalorder %s290, 1
      %s292 = scalar_select %p291, %s290, 1
      %s293 = smul.addr %s292, 4
      %s294 = scalar_lea.vmem %s3, %s293
      %s295 = smul.u32 2, %s20
      %s296 = smul.u32 2, %s20
      %p297 = scmp.lt.s32.totalorder %s21, 1
      %s298 = scalar_select %p297, %s21, 1
      %p299 = scmp.lt.s32.totalorder %s296, 1
      %s300 = scalar_select %p299, %s296, 1
      %s301 = smul.addr %s298, 4
      %s302 = sadd.s32 %s300, %s301
      %s303 = smul.addr %s302, 4
      %s304 = scalar_lea.vmem %s5, %s303
      %s305 = smul.u32 2, %s20
      %v307 = vld [vmem:[%s2] sm:$0xf]
      %v308 = vld [vmem:[%s2 + $0x4] sm:$0xf]
      %v309 = vld [vmem:[%s283] sm:$0xff]
      %v310 = vld [vmem:[%s283 + $0x8] sm:$0xff]
      %v311 = vld [vmem:[%s289] sm:$0xf]
      %v312 = vld [vmem:[%s289 + $0x4] sm:$0xf]
      %v313 = vld [vmem:[%s294] sm:$0xff]
      %v314 = vld [vmem:[%s294 + $0x8] sm:$0xff]
      %v315 = vld [vmem:[%s294 + $0x10] sm:$0xff]
      %v316 = vld [vmem:[%s294 + $0x18] sm:$0xff]
      %v317 = vld [vmem:[%s294 + $0x20] sm:$0xff]
      %v318 = vld [vmem:[%s294 + $0x28] sm:$0xff]
      %v319 = vld [vmem:[%s294 + $0x30] sm:$0xff]
      %v320 = vld [vmem:[%s294 + $0x38] sm:$0xff]
      %v323 = vunpack.c.l.b16 %v311
      %v324 = vunpack.c.l.b16 %v312
      %v325 = vpack.c.b16 %v324, %v323
      %v334 = vunpack.c.l.b16 %v313
      %v335 = vunpack.c.h.b16 %v313
      %v336 = vunpack.c.l.b16 %v314
      %v337 = vunpack.c.h.b16 %v314
      %v338 = vunpack.c.l.b16 %v315
      %v339 = vunpack.c.h.b16 %v315
      %v340 = vunpack.c.l.b16 %v316
      %v341 = vunpack.c.h.b16 %v316
      %v342 = vunpack.c.l.b16 %v317
      %v343 = vunpack.c.h.b16 %v317
      %v344 = vunpack.c.l.b16 %v318
      %v345 = vunpack.c.h.b16 %v318
      %v346 = vunpack.c.l.b16 %v319
      %v347 = vunpack.c.h.b16 %v319
      %v348 = vunpack.c.l.b16 %v320
      %v349 = vunpack.c.h.b16 %v320
      %v350 = vpack.c.b16 %v336, %v334
      %v351 = vpack.c.b16 %v337, %v335
      %v352 = vpack.c.b16 %v340, %v338
      %v353 = vpack.c.b16 %v341, %v339
      %v354 = vpack.c.b16 %v344, %v342
      %v355 = vpack.c.b16 %v345, %v343
      %v356 = vpack.c.b16 %v348, %v346
      %v357 = vpack.c.b16 %v349, %v347
      %vm366 = vcmask 523264
      %v368 = vsel %vm366, %v325, 0
      %370 = vmatpush.bf16.msra.mxu0 0
      %371 = vmatpush.bf16.msra.mxu0 0
      %372 = vmatpush.bf16.msra.mxu0 0
      %373 = vmatpush.bf16.msra.mxu0 0
      %374 = vmatpush.bf16.msra.mxu0 %v356
      %375 = vmatpush.bf16.msra.mxu0 %v354
      %376 = vmatpush.bf16.msra.mxu0 %v352
      %377 = vmatpush.bf16.msra.mxu0 %v350
      %378 = vmatmul.bf16.gmra.mxu0 %v368
      %v379 = vpop.f32.mrf.mxu0
      %v380 = vadd.f32 0.0, %v379
      %v381 = vpop.f32.mrf.mxu0
      %v382 = vadd.f32 0.0, %v381
      %383 = vdwg.mxu0
      %384 = vmatpush.bf16.msra.mxu0 0
      %385 = vmatpush.bf16.msra.mxu0 0
      %386 = vmatpush.bf16.msra.mxu0 0
      %387 = vmatpush.bf16.msra.mxu0 0
      %388 = vmatpush.bf16.msra.mxu0 %v357
      %389 = vmatpush.bf16.msra.mxu0 %v355
      %390 = vmatpush.bf16.msra.mxu0 %v353
      %391 = vmatpush.bf16.msra.mxu0 %v351
      %392 = vmatmul.bf16.gmra.mxu0 %v368
      %v393 = vpop.f32.mrf.mxu0
      %v394 = vadd.f32 0.0, %v393
      %v395 = vpop.f32.mrf.mxu0
      %v396 = vadd.f32 0.0, %v395
      %397 = vdwg.mxu0
      %v400 = vunpack.c.l.b16 %v307
      %v401 = vunpack.c.l.b16 %v308
      %v402 = vpack.c.b16 %v401, %v400
      %v405 = vunpack.c.l.b16 %v309
      %v406 = vunpack.c.h.b16 %v309
      %v407 = vunpack.c.l.b16 %v310
      %v408 = vunpack.c.h.b16 %v310
      %v409 = vpack.c.b16 %v407, %v405
      %v410 = vpack.c.b16 %v408, %v406
      %vm413 = vcmask 130048
      %v415 = vsel %vm413, %v402, 0
      %417 = vmatpush.bf16.msra.mxu0 0
      %418 = vmatpush.bf16.msra.mxu0 0
      %419 = vmatpush.bf16.msra.mxu0 0
      %420 = vmatpush.bf16.msra.mxu0 0
      %421 = vmatpush.bf16.msra.mxu0 0
      %422 = vmatpush.bf16.msra.mxu0 0
      %423 = vmatpush.bf16.msra.mxu0 0
      %424 = vmatpush.bf16.msra.mxu0 %v409
      %425 = vmatmul.bf16.gmra.mxu0 %v415
      %v426 = vpop.f32.mrf.mxu0
      %v427 = vadd.f32 %v380, %v426
      %v428 = vpop.f32.mrf.mxu0
      %v429 = vadd.f32 %v382, %v428
      %430 = vdwg.mxu0
      %431 = vmatpush.bf16.msra.mxu0 0
      %432 = vmatpush.bf16.msra.mxu0 0
      %433 = vmatpush.bf16.msra.mxu0 0
      %434 = vmatpush.bf16.msra.mxu0 0
      %435 = vmatpush.bf16.msra.mxu0 0
      %436 = vmatpush.bf16.msra.mxu0 0
      %437 = vmatpush.bf16.msra.mxu0 0
      %438 = vmatpush.bf16.msra.mxu0 %v410
      %439 = vmatmul.bf16.gmra.mxu0 %v415
      %v440 = vpop.f32.mrf.mxu0
      %v441 = vadd.f32 %v394, %v440
      %v442 = vpop.f32.mrf.mxu0
      %v443 = vadd.f32 %v396, %v442
      %444 = vdwg.mxu0
      %v445 = vld [vmem:[%s4] sm:$0xff]
      %v446 = vld [vmem:[%s4 + $0x8] sm:$0xff]
      %448 = vset.pattern.permute.xlu0 0
      %449 = vperm.xlu0 %448, %v445
      %v450 = vpop.permute.xlu0 %449
      %453 = vset.pattern.permute.xlu0 0
      %454 = vperm.xlu0 %453, %v446
      %v455 = vpop.permute.xlu0 %454
      %v457 = vadd.f32 %v427, %v450
      %v458 = vadd.f32 %v441, %v450
      %v459 = vadd.f32 %v429, %v455
      %v460 = vadd.f32 %v443, %v455
      %v461 = vmax.f32 %v457, 0.0
      %v462 = vmax.f32 %v458, 0.0
      %v463 = vmax.f32 %v459, 0.0
      %v464 = vmax.f32 %v460, 0.0
      %v465 = vpack.c.bf16 %v462, %v461
      %v466 = vpack.c.bf16 %v464, %v463
      %467 = vst [vmem:[%s304] sm:$0xff] %v465
      %468 = vst [vmem:[%s304 + $0x8] sm:$0xff] %v466
      %s469 = smul.u32 2, %s20
      %p470 = scmp.lt.s32.totalorder %s21, 1
      %s471 = scalar_select %p470, %s21, 1
      %p472 = scmp.lt.s32.totalorder %s469, 1
      %s473 = scalar_select %p472, %s469, 1
      %s474 = smul.addr %s471, 4
      %s475 = sadd.s32 %s473, %s474
      %s476 = smul.addr %s475, 4
      %s477 = scalar_lea.vmem %s5, %s476
      // Predicated region
      $region41: #{_lambda_.3} parent=39 // pred_check
        %p478 = pneg %p170
      $region42: #{_lambda_.3} parent=39 // pred_check_branch
        %480 = sbr.rel (%p478) target = $region44
      $region43: #{_lambda_.3} parent=39 // pred_region
        %s481 = smul.u32 2, %s20
      $region44: #{_lambda_.3} parent=39 // pred_fallthru
        _
    $region40: #{_lambda_.3} parent=5 // pred_fallthru
      _
    %p482 = scmp.le.s32.totalorder 2, %s11
    // Predicated region
    $region45: #{_lambda_.3} parent=5 // pred_check
      %p483 = pneg %p482
    $region46: #{_lambda_.3} parent=5 // pred_check_branch
      %485 = sbr.rel (%p483) target = $region48
    $region47: #{_lambda_.3} parent=5 // pred_region
      %s486 = ssub.s32 %s11, 2
      // Predicated region
      $region49: #{_lambda_.3} parent=47 // pred_check
        %p487 = pneg %p176
      $region50: #{_lambda_.3} parent=47 // pred_check_branch
        %489 = sbr.rel (%p487) target = $region52
      $region51: #{_lambda_.3} parent=47 // pred_region
        %s490 = smul.u32 2, %s22
        %p491 = scmp.lt.s32.totalorder %s23, 1
        %s492 = scalar_select %p491, %s23, 1
        %p493 = scmp.lt.s32.totalorder %s490, 1
        %s494 = scalar_select %p493, %s490, 1
        %s495 = smul.addr %s492, 4
        %s496 = sadd.s32 %s494, %s495
        %s497 = smul.addr %s496, 4
        %s498 = scalar_lea.vmem %s5, %s497
      $region52: #{_lambda_.3} parent=47 // pred_fallthru
        _
    $region48: #{_lambda_.3} parent=5 // pred_fallthru
      _
  $region6: #{_lambda_.3} parent=0 // loop_footer
    %s15 = sadd.s32 1, %s11
  $region7: #{_lambda_.3} parent=0 // loop_footer_branch
    %10 = sbr.rel target = $region3
  $region8: #{_lambda_.3} parent=0 // loop_exit
    _

</llo_original>
